<compile_context>
chip_gen: v7x
topology: tpu7x:2x2x1
jax: 0.10.0
libtpu: 0.0.40
codegen_flags: <defaults>
</compile_context>

<pallas_src>
import functools

import jax
import jax.numpy as jnp
from jax.experimental import pallas as pl
from jax.experimental.pallas import tpu as pltpu

NFILTERS = 64
NFC = 64
INPUTS = 44
OUTPUTS = 5
EGO = 4
KSIZE = 4
T = (INPUTS - EGO) // KSIZE          # (44 - 4) / 4 = 10 conv output positions
BN_EPS = 1e-5


def _round_up(n, m):
    return (n + m - 1) // m * m


def _cnnold_kernel(x_ref, xp_ref,
                   w1_ref, s1_ref, t1_ref,
                   w2_ref, s2_ref, t2_ref,
                   wf1e_ref, wf1x_ref, bf1_ref,
                   wf2_ref, bf2_ref,
                   wf3_ref, bf3_ref,
                   out_ref):
    bt = x_ref.shape[0]                                        # batch tile (mult of 8)

    # --- conv1 (k=4, stride=4) as one patch matmul + folded bn1 + relu ------
    # xp_ref is (T, bt, 4); collapsing the leading dims is a pure sublane
    # concatenation (bt % 8 == 0), no relayout.
    xp = xp_ref[...].reshape(T * bt, KSIZE)
    h1 = jnp.dot(xp, w1_ref[...], preferred_element_type=jnp.float32)
    h1 = jnp.maximum(h1 * s1_ref[...] + t1_ref[...], 0.0)      # (T*bt, 64) f32

    # --- conv2 (1x1) as one channel matmul + folded bn2 + relu --------------
    h2 = jnp.dot(h1.astype(w2_ref.dtype), w2_ref[...],
                 preferred_element_type=jnp.float32)
    h2 = jnp.maximum(h2 * s2_ref[...] + t2_ref[...], 0.0)      # (T*bt, 64) f32

    # --- MaxPool1d(10): fixed 10-step vreg-resident reduce ------------------
    # All slices start at multiples of bt (multiple of 8) -> sublane aligned.
    pooled = h2[0:bt, :]
    for t in range(1, T):
        pooled = jnp.maximum(pooled, h2[t * bt:(t + 1) * bt, :])   # (bt, 64)

    # --- fc1 on concat(ego, pooled), expressed as a split matmul ------------
    ego = x_ref[:, :EGO]                                       # (bt, 4)
    z = (jnp.dot(ego, wf1e_ref[...], preferred_element_type=jnp.float32)
         + jnp.dot(pooled.astype(wf1x_ref.dtype), wf1x_ref[...],
                   preferred_element_type=jnp.float32)
         + bf1_ref[...])
    z = jnp.maximum(z, 0.0)

    # --- fc2 + relu ----------------------------------------------------------
    z = jnp.dot(z.astype(wf2_ref.dtype), wf2_ref[...],
                preferred_element_type=jnp.float32) + bf2_ref[...]
    z = jnp.maximum(z, 0.0)

    # --- fc3 -----------------------------------------------------------------
    out = jnp.dot(z.astype(wf3_ref.dtype), wf3_ref[...],
                  preferred_element_type=jnp.float32) + bf3_ref[...]
    out_ref[...] = out.astype(out_ref.dtype)


def cnnold_forward(inputs, p, *, compute_dtype=jnp.float32, btile=256):
    """inputs: (B, 44) float32.  Returns (B, 5) float32."""
    B = inputs.shape[0]
    inputs = inputs.astype(jnp.float32)

    # Batch tiling: tile rows are a multiple of 8 (full sublanes); pad batch.
    bt = min(btile, _round_up(max(B, 1), 8))
    bpad = _round_up(B, bt)
    if bpad != B:
        inputs = jnp.pad(inputs, ((0, bpad - B), (0, 0)))
    grid = (bpad // bt,)

    # T-major stride-4 patches: (bpad, 40) -> (bpad, T, 4) -> (T, bpad, 4).
    xp = inputs[:, EGO:].reshape(bpad, T, KSIZE).transpose(1, 0, 2)

    # Fold conv bias + eval-mode BatchNorm into per-channel scale / shift.
    def fold(conv_b, gamma, beta, mean, var):
        scale = gamma / jnp.sqrt(var + BN_EPS)
        shift = beta - mean * scale + conv_b * scale
        return scale.reshape(1, -1), shift.reshape(1, -1)

    s1, t1 = fold(p["conv1_b"], p["bn1_gamma"], p["bn1_beta"],
                  p["bn1_mean"], p["bn1_var"])
    s2, t2 = fold(p["conv2_b"], p["bn2_gamma"], p["bn2_beta"],
                  p["bn2_mean"], p["bn2_var"])

    cdt = compute_dtype
    x_in = inputs.astype(cdt)
    xp = xp.astype(cdt)
    w1t = p["conv1_w"][:, 0, :].T.astype(cdt)                  # (4, 64)
    w2t = p["conv2_w"][:, :, 0].T.astype(cdt)                  # (64, 64)
    wf1e = p["fc1_w"][:, :EGO].T.astype(cdt)                   # (4, 64)
    wf1x = p["fc1_w"][:, EGO:].T.astype(cdt)                   # (64, 64)
    bf1 = p["fc1_b"].reshape(1, -1)
    wf2t = p["fc2_w"].T.astype(cdt)                            # (64, 64)
    bf2 = p["fc2_b"].reshape(1, -1)
    wf3t = p["fc3_w"].T.astype(cdt)                            # (64, 5)
    bf3 = p["fc3_b"].reshape(1, -1)

    weights = (w1t, s1, t1, w2t, s2, t2, wf1e, wf1x, bf1, wf2t, bf2, wf3t, bf3)

    def resident(arr):
        # Full-array block, constant index map -> DMA'd once, stays in VMEM.
        nd = arr.ndim
        return pl.BlockSpec(arr.shape, lambda i, _nd=nd: (0,) * _nd)

    in_specs = (
        [pl.BlockSpec((bt, INPUTS), lambda i: (i, 0)),          # raw rows (ego)
         pl.BlockSpec((T, bt, KSIZE), lambda i: (0, i, 0))]     # T-major patches
        + [resident(w) for w in weights]
    )
    out_spec = pl.BlockSpec((bt, OUTPUTS), lambda i: (i, 0))

    out = pl.pallas_call(
        _cnnold_kernel,
        out_shape=jax.ShapeDtypeStruct((bpad, OUTPUTS), jnp.float32),
        grid=grid,
        in_specs=in_specs,
        out_specs=out_spec,
        compiler_params=pltpu.CompilerParams(
            dimension_semantics=("parallel",)),
    )(x_in, xp, *weights)

    return out[:B]


def reference_forward(inputs, p):
    """Pure-JAX reference matching the PyTorch forward (BN in eval mode)."""
    B = inputs.shape[0]
    ego = inputs[:, :EGO]
    xp = inputs[:, EGO:].reshape(B, T, KSIZE)
    h = jnp.einsum("btk,ck->btc", xp, p["conv1_w"][:, 0, :]) + p["conv1_b"]
    h = (h - p["bn1_mean"]) / jnp.sqrt(p["bn1_var"] + BN_EPS) \
        * p["bn1_gamma"] + p["bn1_beta"]
    h = jax.nn.relu(h)
    h = jnp.einsum("btc,dc->btd", h, p["conv2_w"][:, :, 0]) + p["conv2_b"]
    h = (h - p["bn2_mean"]) / jnp.sqrt(p["bn2_var"] + BN_EPS) \
        * p["bn2_gamma"] + p["bn2_beta"]
    h = jax.nn.relu(h)
    pooled = jnp.max(h, axis=1)
    enc = jnp.concatenate([ego, pooled], axis=1)
    z = jax.nn.relu(enc @ p["fc1_w"].T + p["fc1_b"])
    z = jax.nn.relu(z @ p["fc2_w"].T + p["fc2_b"])
    return z @ p["fc3_w"].T + p["fc3_b"]


def make_params(key):
    ks = jax.random.split(key, 16)
    n = functools.partial(jax.random.normal, dtype=jnp.float32)
    return {
        "conv1_w": 0.2 * n(ks[0], (NFILTERS, 1, KSIZE)),
        "conv1_b": 0.1 * n(ks[1], (NFILTERS,)),
        "bn1_gamma": 1.0 + 0.1 * n(ks[2], (NFILTERS,)),
        "bn1_beta": 0.05 * n(ks[3], (NFILTERS,)),
        "bn1_mean": 0.05 * n(ks[4], (NFILTERS,)),
        "bn1_var": 1.0 + 0.1 * jnp.abs(n(ks[5], (NFILTERS,))),
        "conv2_w": 0.1 * n(ks[6], (NFILTERS, NFILTERS, 1)),
        "conv2_b": 0.1 * n(ks[7], (NFILTERS,)),
        "bn2_gamma": 1.0 + 0.1 * n(ks[8], (NFILTERS,)),
        "bn2_beta": 0.05 * n(ks[9], (NFILTERS,)),
        "bn2_mean": 0.05 * n(ks[10], (NFILTERS,)),
        "bn2_var": 1.0 + 0.1 * jnp.abs(n(ks[11], (NFILTERS,))),
        "fc1_w": 0.1 * n(ks[12], (NFC, EGO + NFILTERS)),
        "fc1_b": 0.05 * n(ks[13], (NFC,)),
        "fc2_w": 0.1 * n(ks[14], (NFC, NFC)),
        "fc2_b": jnp.zeros((NFC,), jnp.float32),
        "fc3_w": 0.1 * n(ks[15], (OUTPUTS, NFC)),
        "fc3_b": jnp.zeros((OUTPUTS,), jnp.float32),
    }


if __name__ == "__main__":
    key = jax.random.PRNGKey(0)
    k_in, k_par, k_big = jax.random.split(key, 3)
    params = make_params(k_par)

    # Small batch (single grid step, padded to 8 rows).
    B = 2
    x = jax.random.normal(k_in, (B, INPUTS), dtype=jnp.float32)
    out = jax.block_until_ready(cnnold_forward(x, params))
    ref = jax.block_until_ready(reference_forward(x, params))
    assert out.shape == (B, OUTPUTS), out.shape
    assert jnp.allclose(out, ref, atol=1e-3, rtol=1e-3), (out, ref)

    # Larger batch exercising multiple grid steps + batch padding.
    B2 = 50
    x2 = jax.random.normal(k_big, (B2, INPUTS), dtype=jnp.float32)
    out2 = jax.block_until_ready(cnnold_forward(x2, params, btile=16))
    ref2 = jax.block_until_ready(reference_forward(x2, params))
    assert out2.shape == (B2, OUTPUTS), out2.shape
    assert jnp.allclose(out2, ref2, atol=1e-3, rtol=1e-3)

    print("KERNEL_OK")
</pallas_src>

<mosaic_0001>
module attributes {stable_mosaic.version = 11 : i64} {
  func.func @_cnnold_kernel(%arg0: i32, %arg1: memref<8x44xf32, #tpu.memory_space<vmem>>, %arg2: memref<10x8x4xf32, #tpu.memory_space<vmem>>, %arg3: memref<4x64xf32, #tpu.memory_space<vmem>>, %arg4: memref<1x64xf32, #tpu.memory_space<vmem>>, %arg5: memref<1x64xf32, #tpu.memory_space<vmem>>, %arg6: memref<64x64xf32, #tpu.memory_space<vmem>>, %arg7: memref<1x64xf32, #tpu.memory_space<vmem>>, %arg8: memref<1x64xf32, #tpu.memory_space<vmem>>, %arg9: memref<4x64xf32, #tpu.memory_space<vmem>>, %arg10: memref<64x64xf32, #tpu.memory_space<vmem>>, %arg11: memref<1x64xf32, #tpu.memory_space<vmem>>, %arg12: memref<64x64xf32, #tpu.memory_space<vmem>>, %arg13: memref<1x64xf32, #tpu.memory_space<vmem>>, %arg14: memref<64x5xf32, #tpu.memory_space<vmem>>, %arg15: memref<1x5xf32, #tpu.memory_space<vmem>>, %arg16: memref<8x5xf32, #tpu.memory_space<vmem>>) attributes {dimension_semantics = [#tpu.dimension_semantics<parallel>], iteration_bounds = array<i64: 1>, scalar_prefetch = 0 : i64, scratch_operands = 0 : i64, tpu.core_type = #tpu.core_type<tc>, window_params = [{transform_indices = @transform_0, window_bounds = array<i64: 8, 44>}, {transform_indices = @transform_1, window_bounds = array<i64: 10, 8, 4>}, {pipeline_mode = #tpu.pipeline_mode<synchronous>, transform_indices = @transform_2, window_bounds = array<i64: 4, 64>}, {pipeline_mode = #tpu.pipeline_mode<synchronous>, transform_indices = @transform_3, window_bounds = array<i64: 1, 64>}, {pipeline_mode = #tpu.pipeline_mode<synchronous>, transform_indices = @transform_4, window_bounds = array<i64: 1, 64>}, {pipeline_mode = #tpu.pipeline_mode<synchronous>, transform_indices = @transform_5, window_bounds = array<i64: 64, 64>}, {pipeline_mode = #tpu.pipeline_mode<synchronous>, transform_indices = @transform_6, window_bounds = array<i64: 1, 64>}, {pipeline_mode = #tpu.pipeline_mode<synchronous>, transform_indices = @transform_7, window_bounds = array<i64: 1, 64>}, {pipeline_mode = #tpu.pipeline_mode<synchronous>, transform_indices = @transform_8, window_bounds = array<i64: 4, 64>}, {pipeline_mode = #tpu.pipeline_mode<synchronous>, transform_indices = @transform_9, window_bounds = array<i64: 64, 64>}, {pipeline_mode = #tpu.pipeline_mode<synchronous>, transform_indices = @transform_10, window_bounds = array<i64: 1, 64>}, {pipeline_mode = #tpu.pipeline_mode<synchronous>, transform_indices = @transform_11, window_bounds = array<i64: 64, 64>}, {pipeline_mode = #tpu.pipeline_mode<synchronous>, transform_indices = @transform_12, window_bounds = array<i64: 1, 64>}, {pipeline_mode = #tpu.pipeline_mode<synchronous>, transform_indices = @transform_13, window_bounds = array<i64: 64, 5>}, {pipeline_mode = #tpu.pipeline_mode<synchronous>, transform_indices = @transform_14, window_bounds = array<i64: 1, 5>}, {transform_indices = @transform_15, window_bounds = array<i64: 8, 5>}]} {
    %c0 = arith.constant 0 : index
    %c0_0 = arith.constant 0 : index
    %c0_1 = arith.constant 0 : index
    %0 = vector.load %arg2[%c0, %c0_0, %c0_1] : memref<10x8x4xf32, #tpu.memory_space<vmem>>, vector<10x8x4xf32>
    %1 = vector.shape_cast %0 : vector<10x8x4xf32> to vector<80x4xf32>
    %c0_2 = arith.constant 0 : index
    %c0_3 = arith.constant 0 : index
    %2 = vector.load %arg3[%c0_2, %c0_3] : memref<4x64xf32, #tpu.memory_space<vmem>>, vector<4x64xf32>
    %cst = arith.constant dense<0.000000e+00> : vector<80x64xf32>
    %3 = tpu.matmul %1, %2, %cst {dimension_numbers = #tpu.dot_dimension_numbers<[1], [0], [0], [1], [0, 0, 1, 1], [], []>} : vector<80x4xf32>, vector<4x64xf32>, vector<80x64xf32> -> vector<80x64xf32>
    %c0_4 = arith.constant 0 : index
    %c0_5 = arith.constant 0 : index
    %4 = vector.load %arg4[%c0_4, %c0_5] : memref<1x64xf32, #tpu.memory_space<vmem>>, vector<1x64xf32>
    %5 = vector.broadcast %4 : vector<1x64xf32> to vector<80x64xf32>
    %6 = arith.mulf %3, %5 : vector<80x64xf32>
    %c0_6 = arith.constant 0 : index
    %c0_7 = arith.constant 0 : index
    %7 = vector.load %arg5[%c0_6, %c0_7] : memref<1x64xf32, #tpu.memory_space<vmem>>, vector<1x64xf32>
    %8 = vector.broadcast %7 : vector<1x64xf32> to vector<80x64xf32>
    %9 = arith.addf %6, %8 : vector<80x64xf32>
    %cst_8 = arith.constant 0.000000e+00 : f32
    %10 = vector.broadcast %cst_8 : f32 to vector<80x64xf32>
    %11 = arith.maximumf %9, %10 : vector<80x64xf32>
    %c0_9 = arith.constant 0 : index
    %c0_10 = arith.constant 0 : index
    %12 = vector.load %arg6[%c0_9, %c0_10] : memref<64x64xf32, #tpu.memory_space<vmem>>, vector<64x64xf32>
    %cst_11 = arith.constant dense<0.000000e+00> : vector<80x64xf32>
    %13 = tpu.matmul %11, %12, %cst_11 {dimension_numbers = #tpu.dot_dimension_numbers<[1], [0], [0], [1], [0, 0, 1, 1], [], []>} : vector<80x64xf32>, vector<64x64xf32>, vector<80x64xf32> -> vector<80x64xf32>
    %c0_12 = arith.constant 0 : index
    %c0_13 = arith.constant 0 : index
    %14 = vector.load %arg7[%c0_12, %c0_13] : memref<1x64xf32, #tpu.memory_space<vmem>>, vector<1x64xf32>
    %15 = vector.broadcast %14 : vector<1x64xf32> to vector<80x64xf32>
    %16 = arith.mulf %13, %15 : vector<80x64xf32>
    %c0_14 = arith.constant 0 : index
    %c0_15 = arith.constant 0 : index
    %17 = vector.load %arg8[%c0_14, %c0_15] : memref<1x64xf32, #tpu.memory_space<vmem>>, vector<1x64xf32>
    %18 = vector.broadcast %17 : vector<1x64xf32> to vector<80x64xf32>
    %19 = arith.addf %16, %18 : vector<80x64xf32>
    %cst_16 = arith.constant 0.000000e+00 : f32
    %20 = vector.broadcast %cst_16 : f32 to vector<80x64xf32>
    %21 = arith.maximumf %19, %20 : vector<80x64xf32>
    %22 = vector.extract_strided_slice %21 {offsets = [0, 0], sizes = [8, 64], strides = [1, 1]} : vector<80x64xf32> to vector<8x64xf32>
    %23 = vector.extract_strided_slice %21 {offsets = [8, 0], sizes = [8, 64], strides = [1, 1]} : vector<80x64xf32> to vector<8x64xf32>
    %24 = arith.maximumf %22, %23 : vector<8x64xf32>
    %25 = vector.extract_strided_slice %21 {offsets = [16, 0], sizes = [8, 64], strides = [1, 1]} : vector<80x64xf32> to vector<8x64xf32>
    %26 = arith.maximumf %24, %25 : vector<8x64xf32>
    %27 = vector.extract_strided_slice %21 {offsets = [24, 0], sizes = [8, 64], strides = [1, 1]} : vector<80x64xf32> to vector<8x64xf32>
    %28 = arith.maximumf %26, %27 : vector<8x64xf32>
    %29 = vector.extract_strided_slice %21 {offsets = [32, 0], sizes = [8, 64], strides = [1, 1]} : vector<80x64xf32> to vector<8x64xf32>
    %30 = arith.maximumf %28, %29 : vector<8x64xf32>
    %31 = vector.extract_strided_slice %21 {offsets = [40, 0], sizes = [8, 64], strides = [1, 1]} : vector<80x64xf32> to vector<8x64xf32>
    %32 = arith.maximumf %30, %31 : vector<8x64xf32>
    %33 = vector.extract_strided_slice %21 {offsets = [48, 0], sizes = [8, 64], strides = [1, 1]} : vector<80x64xf32> to vector<8x64xf32>
    %34 = arith.maximumf %32, %33 : vector<8x64xf32>
    %35 = vector.extract_strided_slice %21 {offsets = [56, 0], sizes = [8, 64], strides = [1, 1]} : vector<80x64xf32> to vector<8x64xf32>
    %36 = arith.maximumf %34, %35 : vector<8x64xf32>
    %37 = vector.extract_strided_slice %21 {offsets = [64, 0], sizes = [8, 64], strides = [1, 1]} : vector<80x64xf32> to vector<8x64xf32>
    %38 = arith.maximumf %36, %37 : vector<8x64xf32>
    %39 = vector.extract_strided_slice %21 {offsets = [72, 0], sizes = [8, 64], strides = [1, 1]} : vector<80x64xf32> to vector<8x64xf32>
    %40 = arith.maximumf %38, %39 : vector<8x64xf32>
    %c0_17 = arith.constant 0 : index
    %c0_18 = arith.constant 0 : index
    %41 = vector.load %arg1[%c0_17, %c0_18] : memref<8x44xf32, #tpu.memory_space<vmem>>, vector<8x4xf32>
    %c0_19 = arith.constant 0 : index
    %c0_20 = arith.constant 0 : index
    %42 = vector.load %arg9[%c0_19, %c0_20] : memref<4x64xf32, #tpu.memory_space<vmem>>, vector<4x64xf32>
    %cst_21 = arith.constant dense<0.000000e+00> : vector<8x64xf32>
    %43 = tpu.matmul %41, %42, %cst_21 {dimension_numbers = #tpu.dot_dimension_numbers<[1], [0], [0], [1], [0, 0, 1, 1], [], []>} : vector<8x4xf32>, vector<4x64xf32>, vector<8x64xf32> -> vector<8x64xf32>
    %c0_22 = arith.constant 0 : index
    %c0_23 = arith.constant 0 : index
    %44 = vector.load %arg10[%c0_22, %c0_23] : memref<64x64xf32, #tpu.memory_space<vmem>>, vector<64x64xf32>
    %cst_24 = arith.constant dense<0.000000e+00> : vector<8x64xf32>
    %45 = tpu.matmul %40, %44, %cst_24 {dimension_numbers = #tpu.dot_dimension_numbers<[1], [0], [0], [1], [0, 0, 1, 1], [], []>} : vector<8x64xf32>, vector<64x64xf32>, vector<8x64xf32> -> vector<8x64xf32>
    %46 = arith.addf %43, %45 : vector<8x64xf32>
    %c0_25 = arith.constant 0 : index
    %c0_26 = arith.constant 0 : index
    %47 = vector.load %arg11[%c0_25, %c0_26] : memref<1x64xf32, #tpu.memory_space<vmem>>, vector<1x64xf32>
    %48 = vector.broadcast %47 : vector<1x64xf32> to vector<8x64xf32>
    %49 = arith.addf %46, %48 : vector<8x64xf32>
    %cst_27 = arith.constant 0.000000e+00 : f32
    %50 = vector.broadcast %cst_27 : f32 to vector<8x64xf32>
    %51 = arith.maximumf %49, %50 : vector<8x64xf32>
    %c0_28 = arith.constant 0 : index
    %c0_29 = arith.constant 0 : index
    %52 = vector.load %arg12[%c0_28, %c0_29] : memref<64x64xf32, #tpu.memory_space<vmem>>, vector<64x64xf32>
    %cst_30 = arith.constant dense<0.000000e+00> : vector<8x64xf32>
    %53 = tpu.matmul %51, %52, %cst_30 {dimension_numbers = #tpu.dot_dimension_numbers<[1], [0], [0], [1], [0, 0, 1, 1], [], []>} : vector<8x64xf32>, vector<64x64xf32>, vector<8x64xf32> -> vector<8x64xf32>
    %c0_31 = arith.constant 0 : index
    %c0_32 = arith.constant 0 : index
    %54 = vector.load %arg13[%c0_31, %c0_32] : memref<1x64xf32, #tpu.memory_space<vmem>>, vector<1x64xf32>
    %55 = vector.broadcast %54 : vector<1x64xf32> to vector<8x64xf32>
    %56 = arith.addf %53, %55 : vector<8x64xf32>
    %cst_33 = arith.constant 0.000000e+00 : f32
    %57 = vector.broadcast %cst_33 : f32 to vector<8x64xf32>
    %58 = arith.maximumf %56, %57 : vector<8x64xf32>
    %c0_34 = arith.constant 0 : index
    %c0_35 = arith.constant 0 : index
    %59 = vector.load %arg14[%c0_34, %c0_35] : memref<64x5xf32, #tpu.memory_space<vmem>>, vector<64x5xf32>
    %cst_36 = arith.constant dense<0.000000e+00> : vector<8x5xf32>
    %60 = tpu.matmul %58, %59, %cst_36 {dimension_numbers = #tpu.dot_dimension_numbers<[1], [0], [0], [1], [0, 0, 1, 1], [], []>} : vector<8x64xf32>, vector<64x5xf32>, vector<8x5xf32> -> vector<8x5xf32>
    %c0_37 = arith.constant 0 : index
    %c0_38 = arith.constant 0 : index
    %61 = vector.load %arg15[%c0_37, %c0_38] : memref<1x5xf32, #tpu.memory_space<vmem>>, vector<1x5xf32>
    %62 = vector.broadcast %61 : vector<1x5xf32> to vector<8x5xf32>
    %63 = arith.addf %60, %62 : vector<8x5xf32>
    %c0_39 = arith.constant 0 : index
    %c0_40 = arith.constant 0 : index
    %64 = vector.load %arg16[%c0_39, %c0_40] : memref<8x5xf32, #tpu.memory_space<vmem>>, vector<8x5xf32>
    tpu.vector_store %arg16[%c0_39, %c0_40], %63 {strides = array<i32>} : memref<8x5xf32, #tpu.memory_space<vmem>>, vector<8x5xf32>,
    return
  }
  func.func @transform_0(%arg0: i32) -> (i32, i32) {
    %c0_i32 = arith.constant 0 : i32
    %c0_i32_0 = arith.constant 0 : i32
    return %arg0, %c0_i32 : i32, i32
  }
  func.func @transform_1(%arg0: i32) -> (i32, i32, i32) {
    %c0_i32 = arith.constant 0 : i32
    %c0_i32_0 = arith.constant 0 : i32
    %c0_i32_1 = arith.constant 0 : i32
    return %c0_i32, %arg0, %c0_i32_0 : i32, i32, i32
  }
  func.func @transform_2(%arg0: i32) -> (i32, i32) {
    %c0_i32 = arith.constant 0 : i32
    %c0_i32_0 = arith.constant 0 : i32
    %c0_i32_1 = arith.constant 0 : i32
    return %c0_i32, %c0_i32_0 : i32, i32
  }
  func.func @transform_3(%arg0: i32) -> (i32, i32) {
    %c0_i32 = arith.constant 0 : i32
    %c0_i32_0 = arith.constant 0 : i32
    %c0_i32_1 = arith.constant 0 : i32
    return %c0_i32, %c0_i32_0 : i32, i32
  }
  func.func @transform_4(%arg0: i32) -> (i32, i32) {
    %c0_i32 = arith.constant 0 : i32
    %c0_i32_0 = arith.constant 0 : i32
    %c0_i32_1 = arith.constant 0 : i32
    return %c0_i32, %c0_i32_0 : i32, i32
  }
  func.func @transform_5(%arg0: i32) -> (i32, i32) {
    %c0_i32 = arith.constant 0 : i32
    %c0_i32_0 = arith.constant 0 : i32
    %c0_i32_1 = arith.constant 0 : i32
    return %c0_i32, %c0_i32_0 : i32, i32
  }
  func.func @transform_6(%arg0: i32) -> (i32, i32) {
    %c0_i32 = arith.constant 0 : i32
    %c0_i32_0 = arith.constant 0 : i32
    %c0_i32_1 = arith.constant 0 : i32
    return %c0_i32, %c0_i32_0 : i32, i32
  }
  func.func @transform_7(%arg0: i32) -> (i32, i32) {
    %c0_i32 = arith.constant 0 : i32
    %c0_i32_0 = arith.constant 0 : i32
    %c0_i32_1 = arith.constant 0 : i32
    return %c0_i32, %c0_i32_0 : i32, i32
  }
  func.func @transform_8(%arg0: i32) -> (i32, i32) {
    %c0_i32 = arith.constant 0 : i32
    %c0_i32_0 = arith.constant 0 : i32
    %c0_i32_1 = arith.constant 0 : i32
    return %c0_i32, %c0_i32_0 : i32, i32
  }
  func.func @transform_9(%arg0: i32) -> (i32, i32) {
    %c0_i32 = arith.constant 0 : i32
    %c0_i32_0 = arith.constant 0 : i32
    %c0_i32_1 = arith.constant 0 : i32
    return %c0_i32, %c0_i32_0 : i32, i32
  }
  func.func @transform_10(%arg0: i32) -> (i32, i32) {
    %c0_i32 = arith.constant 0 : i32
    %c0_i32_0 = arith.constant 0 : i32
    %c0_i32_1 = arith.constant 0 : i32
    return %c0_i32, %c0_i32_0 : i32, i32
  }
  func.func @transform_11(%arg0: i32) -> (i32, i32) {
    %c0_i32 = arith.constant 0 : i32
    %c0_i32_0 = arith.constant 0 : i32
    %c0_i32_1 = arith.constant 0 : i32
    return %c0_i32, %c0_i32_0 : i32, i32
  }
  func.func @transform_12(%arg0: i32) -> (i32, i32) {
    %c0_i32 = arith.constant 0 : i32
    %c0_i32_0 = arith.constant 0 : i32
    %c0_i32_1 = arith.constant 0 : i32
    return %c0_i32, %c0_i32_0 : i32, i32
  }
  func.func @transform_13(%arg0: i32) -> (i32, i32) {
    %c0_i32 = arith.constant 0 : i32
    %c0_i32_0 = arith.constant 0 : i32
    %c0_i32_1 = arith.constant 0 : i32
    return %c0_i32, %c0_i32_0 : i32, i32
  }
  func.func @transform_14(%arg0: i32) -> (i32, i32) {
    %c0_i32 = arith.constant 0 : i32
    %c0_i32_0 = arith.constant 0 : i32
    %c0_i32_1 = arith.constant 0 : i32
    return %c0_i32, %c0_i32_0 : i32, i32
  }
  func.func @transform_15(%arg0: i32) -> (i32, i32) {
    %c0_i32 = arith.constant 0 : i32
    %c0_i32_0 = arith.constant 0 : i32
    return %arg0, %c0_i32 : i32, i32
  }
}

</mosaic_0001>

<llo_original>
// kernel: tpu_custom_call.1
$region0: #{tpu_custom_call.1}
  #allocation0 [shape = 'u32[]', space=smem, size = 0x4, offset = 0x4, fixed_abs, tag = 'smem constant byte address 0x4 - core index']
  #allocation1 [shape = 'u32[144,128]{1,0:T(1,128)}', space=vmem, size = 0x12000, scoped, tag = 'internal scratch']
  %s0 = inlined_call_operand.hbm [shape: f32[8,44], index: 0, kind: input, shape index: {}]
  %s1 = inlined_call_operand.vmem [shape: f32[10,8,4], index: 1, kind: input, shape index: {}]
  %s2 = inlined_call_operand.hbm [shape: f32[4,64], index: 2, kind: input, shape index: {}]
  %s3 = inlined_call_operand.vmem [shape: f32[1,64], index: 3, kind: input, shape index: {}]
  %s4 = inlined_call_operand.vmem [shape: f32[1,64], index: 4, kind: input, shape index: {}]
  %s5 = inlined_call_operand.vmem [shape: f32[64,64], index: 5, kind: input, shape index: {}]
  %s6 = inlined_call_operand.hbm [shape: f32[1,64], index: 6, kind: input, shape index: {}]
  %s7 = inlined_call_operand.vmem [shape: f32[1,64], index: 7, kind: input, shape index: {}]
  %s8 = inlined_call_operand.vmem [shape: f32[4,64], index: 8, kind: input, shape index: {}]
  %s9 = inlined_call_operand.vmem [shape: f32[64,64], index: 9, kind: input, shape index: {}]
  %s10 = inlined_call_operand.vmem [shape: f32[1,64], index: 10, kind: input, shape index: {}]
  %s11 = inlined_call_operand.vmem [shape: f32[64,64], index: 11, kind: input, shape index: {}]
  %s12 = inlined_call_operand.vmem [shape: f32[1,64], index: 12, kind: input, shape index: {}]
  %s13 = inlined_call_operand.vmem [shape: f32[64,5], index: 13, kind: input, shape index: {}]
  %s14 = inlined_call_operand.vmem [shape: f32[1,5], index: 14, kind: input, shape index: {}]
  %s15 = inlined_call_operand.hbm [shape: f32[8,5], index: 15, kind: output, shape index: {}]
  %s16 = sld [smem:[#allocation0]]
  $region82: #{tpu_custom_call.1} parent=0
    _
  %s18 = ssub.s32 1, %s16
  %s19 = scalar_select 0, %s18, %s16
  $region1: #{tpu_custom_call.1} parent=0
    #allocation2 [shape = 'u8[4096]{0}', space=vmem, size = 0x1000, scoped, tag = 'input window, operand 0, single buffered']
    #allocation3 [shape = 's32[1]{0}', space=sflag, size = 0x4, scoped, tag = 'scoped memory for tpu_custom_call.1']
    #allocation4 [shape = 's32[1]{0}', space=sflag, size = 0x4, scoped, tag = 'scoped memory for tpu_custom_call.1']
    #allocation5 [shape = 'u8[2048]{0}', space=vmem, size = 0x800, scoped, tag = 'input window, operand 2, single buffered']
    #allocation6 [shape = 's32[1]{0}', space=sflag, size = 0x4, scoped, tag = 'scoped memory for tpu_custom_call.1']
    #allocation7 [shape = 'u8[512]{0}', space=vmem, size = 0x400, scoped, tag = 'input window, operand 6, single buffered']
    #allocation8 [shape = 'u8[4096]{0}', space=vmem, size = 0x1000, scoped, tag = 'output window, operand 0, single buffered']
    %20 = vsyncpa [#allocation3], 0
    %21 = vsyncpa [#allocation6], 0
    %22 = vsyncpa [#allocation4], 0
    // Predicated region
    $region2: #{tpu_custom_call.1} parent=1 // pred_check
      _
    $region3: #{tpu_custom_call.1} parent=1 // pred_check_branch
      %24 = sbr.rel (0) target = $region5
    $region4: #{tpu_custom_call.1} parent=1 // pred_region
      %s26 = ssub.s32 128, 128
      %27 = vsyncadd [#allocation3], %s26
      %s29 = sshll.u32 [#allocation2], 4
      %s30 = int_to_ptr.vmem [resolvable:$true] %s29
      %32 = dma.hbm_to_vmem [thread:$0]  %s0, 128, %s30, [#allocation3]
    $region5: #{tpu_custom_call.1} parent=1 // pred_fallthru
      _
    // Predicated region
    $region6: #{tpu_custom_call.1} parent=1 // pred_check
      _
    $region7: #{tpu_custom_call.1} parent=1 // pred_check_branch
      %34 = sbr.rel (0) target = $region9
    $region8: #{tpu_custom_call.1} parent=1 // pred_region
      _
    $region9: #{tpu_custom_call.1} parent=1 // pred_fallthru
      _
    // Predicated region
    $region10: #{tpu_custom_call.1} parent=1 // pred_check
      _
    $region11: #{tpu_custom_call.1} parent=1 // pred_check_branch
      %36 = sbr.rel (0) target = $region13
    $region12: #{tpu_custom_call.1} parent=1 // pred_region
      %s38 = ssub.s32 64, 64
      %39 = vsyncadd [#allocation6], %s38
      %s41 = sshll.u32 [#allocation5], 4
      %s42 = int_to_ptr.vmem [resolvable:$true] %s41
      %44 = dma.hbm_to_vmem [thread:$0]  %s2, 64, %s42, [#allocation6]
    $region13: #{tpu_custom_call.1} parent=1 // pred_fallthru
      _
    // Predicated region
    $region14: #{tpu_custom_call.1} parent=1 // pred_check
      _
    $region15: #{tpu_custom_call.1} parent=1 // pred_check_branch
      %46 = sbr.rel (0) target = $region17
    $region16: #{tpu_custom_call.1} parent=1 // pred_region
      _
    $region17: #{tpu_custom_call.1} parent=1 // pred_fallthru
      _
    // Predicated region
    $region18: #{tpu_custom_call.1} parent=1 // pred_check
      _
    $region19: #{tpu_custom_call.1} parent=1 // pred_check_branch
      %48 = sbr.rel (0) target = $region21
    $region20: #{tpu_custom_call.1} parent=1 // pred_region
      _
    $region21: #{tpu_custom_call.1} parent=1 // pred_fallthru
      _
    // Predicated region
    $region22: #{tpu_custom_call.1} parent=1 // pred_check
      _
    $region23: #{tpu_custom_call.1} parent=1 // pred_check_branch
      %50 = sbr.rel (0) target = $region25
    $region24: #{tpu_custom_call.1} parent=1 // pred_region
      _
    $region25: #{tpu_custom_call.1} parent=1 // pred_fallthru
      _
    // Predicated region
    $region26: #{tpu_custom_call.1} parent=1 // pred_check
      _
    $region27: #{tpu_custom_call.1} parent=1 // pred_check_branch
      %52 = sbr.rel (0) target = $region29
    $region28: #{tpu_custom_call.1} parent=1 // pred_region
      %s54 = ssub.s32 16, 16
      %55 = vsyncadd [#allocation6], %s54
      %s57 = sshll.u32 [#allocation7], 4
      %s58 = int_to_ptr.vmem [resolvable:$true] %s57
      %60 = dma.hbm_to_vmem [thread:$0]  %s6, 16, %s58, [#allocation6]
    $region29: #{tpu_custom_call.1} parent=1 // pred_fallthru
      _
    // Predicated region
    $region30: #{tpu_custom_call.1} parent=1 // pred_check
      _
    $region31: #{tpu_custom_call.1} parent=1 // pred_check_branch
      %62 = sbr.rel (0) target = $region33
    $region32: #{tpu_custom_call.1} parent=1 // pred_region
      _
    $region33: #{tpu_custom_call.1} parent=1 // pred_fallthru
      _
    // Predicated region
    $region34: #{tpu_custom_call.1} parent=1 // pred_check
      _
    $region35: #{tpu_custom_call.1} parent=1 // pred_check_branch
      %64 = sbr.rel (0) target = $region37
    $region36: #{tpu_custom_call.1} parent=1 // pred_region
      _
    $region37: #{tpu_custom_call.1} parent=1 // pred_fallthru
      _
    // Predicated region
    $region38: #{tpu_custom_call.1} parent=1 // pred_check
      _
    $region39: #{tpu_custom_call.1} parent=1 // pred_check_branch
      %66 = sbr.rel (0) target = $region41
    $region40: #{tpu_custom_call.1} parent=1 // pred_region
      _
    $region41: #{tpu_custom_call.1} parent=1 // pred_fallthru
      _
    // Predicated region
    $region42: #{tpu_custom_call.1} parent=1 // pred_check
      _
    $region43: #{tpu_custom_call.1} parent=1 // pred_check_branch
      %68 = sbr.rel (0) target = $region45
    $region44: #{tpu_custom_call.1} parent=1 // pred_region
      _
    $region45: #{tpu_custom_call.1} parent=1 // pred_fallthru
      _
    // Predicated region
    $region46: #{tpu_custom_call.1} parent=1 // pred_check
      _
    $region47: #{tpu_custom_call.1} parent=1 // pred_check_branch
      %70 = sbr.rel (0) target = $region49
    $region48: #{tpu_custom_call.1} parent=1 // pred_region
      _
    $region49: #{tpu_custom_call.1} parent=1 // pred_fallthru
      _
    // Predicated region
    $region50: #{tpu_custom_call.1} parent=1 // pred_check
      _
    $region51: #{tpu_custom_call.1} parent=1 // pred_check_branch
      %72 = sbr.rel (0) target = $region53
    $region52: #{tpu_custom_call.1} parent=1 // pred_region
      _
    $region53: #{tpu_custom_call.1} parent=1 // pred_fallthru
      _
    // Predicated region
    $region54: #{tpu_custom_call.1} parent=1 // pred_check
      _
    $region55: #{tpu_custom_call.1} parent=1 // pred_check_branch
      %74 = sbr.rel (0) target = $region57
    $region56: #{tpu_custom_call.1} parent=1 // pred_region
      _
    $region57: #{tpu_custom_call.1} parent=1 // pred_fallthru
      _
    // Predicated region
    $region58: #{tpu_custom_call.1} parent=1 // pred_check
      _
    $region59: #{tpu_custom_call.1} parent=1 // pred_check_branch
      %76 = sbr.rel (0) target = $region61
    $region60: #{tpu_custom_call.1} parent=1 // pred_region
      _
    $region61: #{tpu_custom_call.1} parent=1 // pred_fallthru
      _
    // Predicated region
    $region62: #{tpu_custom_call.1} parent=1 // pred_check
      _
    $region63: #{tpu_custom_call.1} parent=1 // pred_check_branch
      %78 = sbr.rel (0) target = $region65
    $region64: #{tpu_custom_call.1} parent=1 // pred_region
      %79 = dma.done [#allocation3], 128
    $region65: #{tpu_custom_call.1} parent=1 // pred_fallthru
      _
    // Predicated region
    $region66: #{tpu_custom_call.1} parent=1 // pred_check
      _
    $region67: #{tpu_custom_call.1} parent=1 // pred_check_branch
      %81 = sbr.rel (0) target = $region69
    $region68: #{tpu_custom_call.1} parent=1 // pred_region
      %82 = dma.done [#allocation6], 64
    $region69: #{tpu_custom_call.1} parent=1 // pred_fallthru
      _
    // Predicated region
    $region70: #{tpu_custom_call.1} parent=1 // pred_check
      _
    $region71: #{tpu_custom_call.1} parent=1 // pred_check_branch
      %84 = sbr.rel (0) target = $region73
    $region72: #{tpu_custom_call.1} parent=1 // pred_region
      %85 = dma.done [#allocation6], 16
    $region73: #{tpu_custom_call.1} parent=1 // pred_fallthru
      _
    %v86 = vld [vmem:[%s1] sm:$0xff]
    %v87 = vld [vmem:[%s1 + $0x8] sm:$0xff]
    %v88 = vld [vmem:[%s1 + $0x10] sm:$0xff]
    %v89 = vld [vmem:[%s1 + $0x18] sm:$0xff]
    %v90 = vld [vmem:[%s1 + $0x20] sm:$0xff]
    %v91 = vld [vmem:[%s1 + $0x28] sm:$0xff]
    %v92 = vld [vmem:[%s1 + $0x30] sm:$0xff]
    %v93 = vld [vmem:[%s1 + $0x38] sm:$0xff]
    %v94 = vld [vmem:[%s1 + $0x40] sm:$0xff]
    %v95 = vld [vmem:[%s1 + $0x48] sm:$0xff]
    %v96 = vld [vmem:[#allocation5] sm:$0xf]
    %vm97 = vcmask 31744
    %v99 = vsel %vm97, %v86, 0
    %v102 = vsel %vm97, %v87, 0
    %v105 = vsel %vm97, %v88, 0
    %v108 = vsel %vm97, %v89, 0
    %v111 = vsel %vm97, %v90, 0
    %v114 = vsel %vm97, %v91, 0
    %v117 = vsel %vm97, %v92, 0
    %v120 = vsel %vm97, %v93, 0
    %v123 = vsel %vm97, %v94, 0
    %v126 = vsel %vm97, %v95, 0
    %vm128 = vcmask 1043456
    %v130 = vsel %vm128, %v96, 0
    %132 = vmatprep.subr.mxu0 0.0
    %133 = vmatpush1.msra.mxu0 %v130
    %134 = vmatprep.subr.mxu0 0.0
    %135 = vmatpush1.msra.mxu0 0.0
    %136 = vmatprep.subr.mxu0 0.0
    %137 = vmatpush1.msra.mxu0 0.0
    %138 = vmatprep.subr.mxu0 0.0
    %139 = vmatpush1.msra.mxu0 0.0
    %140 = vmatprep.subr.mxu0 0.0
    %141 = vmatpush1.msra.mxu0 0.0
    %142 = vmatprep.subr.mxu0 0.0
    %143 = vmatpush1.msra.mxu0 0.0
    %144 = vmatprep.subr.mxu0 0.0
    %145 = vmatpush1.msra.mxu0 0.0
    %146 = vmatprep.subr.mxu0 0.0
    %147 = vmatpush1.msra.mxu0 0.0
    %148 = vmatprep.subr.mxu0 0.0
    %149 = vmatpush1.msra.mxu0 0.0
    %150 = vmatprep.subr.mxu0 0.0
    %151 = vmatpush1.msra.mxu0 0.0
    %152 = vmatprep.subr.mxu0 0.0
    %153 = vmatpush1.msra.mxu0 0.0
    %154 = vmatprep.subr.mxu0 0.0
    %155 = vmatpush1.msra.mxu0 0.0
    %156 = vmatprep.subr.mxu0 0.0
    %157 = vmatpush1.msra.mxu0 0.0
    %158 = vmatprep.subr.mxu0 0.0
    %159 = vmatpush1.msra.mxu0 0.0
    %160 = vmatprep.subr.mxu0 0.0
    %161 = vmatpush1.msra.mxu0 0.0
    %162 = vmatprep.subr.mxu0 0.0
    %163 = vmatpush1.msra.mxu0 0.0
    %164 = vmatprep.subr.mxu0 0.0
    %165 = vmatpush1.msra.mxu0 0.0
    %166 = vmatprep.subr.mxu0 0.0
    %167 = vmatpush1.msra.mxu0 0.0
    %168 = vmatprep.subr.mxu0 0.0
    %169 = vmatpush1.msra.mxu0 0.0
    %170 = vmatprep.subr.mxu0 0.0
    %171 = vmatpush1.msra.mxu0 0.0
    %172 = vmatprep.subr.mxu0 0.0
    %173 = vmatpush1.msra.mxu0 0.0
    %174 = vmatprep.subr.mxu0 0.0
    %175 = vmatpush1.msra.mxu0 0.0
    %176 = vmatprep.subr.mxu0 0.0
    %177 = vmatpush1.msra.mxu0 0.0
    %178 = vmatprep.subr.mxu0 0.0
    %179 = vmatpush1.msra.mxu0 0.0
    %180 = vmatprep.subr.mxu0 0.0
    %181 = vmatpush1.msra.mxu0 0.0
    %182 = vmatprep.subr.mxu0 0.0
    %183 = vmatpush1.msra.mxu0 0.0
    %184 = vmatprep.subr.mxu0 0.0
    %185 = vmatpush1.msra.mxu0 0.0
    %186 = vmatprep.subr.mxu0 0.0
    %187 = vmatpush1.msra.mxu0 0.0
    %188 = vmatprep.subr.mxu0 0.0
    %189 = vmatpush1.msra.mxu0 0.0
    %190 = vmatprep.subr.mxu0 0.0
    %191 = vmatpush1.msra.mxu0 0.0
    %192 = vmatprep.subr.mxu0 0.0
    %193 = vmatpush1.msra.mxu0 0.0
    %194 = vmatprep.subr.mxu0 0.0
    %195 = vmatpush1.msra.mxu0 0.0
    %196 = vmatprep.mubr.f32.mxu0 0.0
    %197 = vmatmul.mubr.f32.gmra.mrb[0].mxu0 %v99
    %v198 = vpop.f32.mrb[0].mxu0
    %v199 = vadd.f32 0.0, %v198
    %v200 = vpop.f32.mrb[0].mxu0
    %201 = vmatprep.mubr.f32.mxu0 0.0
    %202 = vmatmul.mubr.f32.gmra.mrb[0].mxu0 %v102
    %v203 = vpop.f32.mrb[0].mxu0
    %v204 = vadd.f32 0.0, %v203
    %v205 = vpop.f32.mrb[0].mxu0
    %206 = vmatprep.mubr.f32.mxu0 0.0
    %207 = vmatmul.mubr.f32.gmra.mrb[0].mxu0 %v105
    %v208 = vpop.f32.mrb[0].mxu0
    %v209 = vadd.f32 0.0, %v208
    %v210 = vpop.f32.mrb[0].mxu0
    %211 = vmatprep.mubr.f32.mxu0 0.0
    %212 = vmatmul.mubr.f32.gmra.mrb[0].mxu0 %v108
    %v213 = vpop.f32.mrb[0].mxu0
    %v214 = vadd.f32 0.0, %v213
    %v215 = vpop.f32.mrb[0].mxu0
    %216 = vmatprep.mubr.f32.mxu0 0.0
    %217 = vmatmul.mubr.f32.gmra.mrb[0].mxu0 %v111
    %v218 = vpop.f32.mrb[0].mxu0
    %v219 = vadd.f32 0.0, %v218
    %v220 = vpop.f32.mrb[0].mxu0
    %221 = vmatprep.mubr.f32.mxu0 0.0
    %222 = vmatmul.mubr.f32.gmra.mrb[0].mxu0 %v114
    %v223 = vpop.f32.mrb[0].mxu0
    %v224 = vadd.f32 0.0, %v223
    %v225 = vpop.f32.mrb[0].mxu0
    %226 = vmatprep.mubr.f32.mxu0 0.0
    %227 = vmatmul.mubr.f32.gmra.mrb[0].mxu0 %v117
    %v228 = vpop.f32.mrb[0].mxu0
    %v229 = vadd.f32 0.0, %v228
    %v230 = vpop.f32.mrb[0].mxu0
    %231 = vmatprep.mubr.f32.mxu0 0.0
    %232 = vmatmul.mubr.f32.gmra.mrb[0].mxu0 %v120
    %v233 = vpop.f32.mrb[0].mxu0
    %v234 = vadd.f32 0.0, %v233
    %v235 = vpop.f32.mrb[0].mxu0
    %236 = vmatprep.mubr.f32.mxu0 0.0
    %237 = vmatmul.mubr.f32.gmra.mrb[0].mxu0 %v123
    %v238 = vpop.f32.mrb[0].mxu0
    %v239 = vadd.f32 0.0, %v238
    %v240 = vpop.f32.mrb[0].mxu0
    %241 = vmatprep.mubr.f32.mxu0 0.0
    %242 = vmatmul.mubr.f32.gmra.mrb[0].mxu0 %v126
    %v243 = vpop.f32.mrb[0].mxu0
    %v244 = vadd.f32 0.0, %v243
    %v245 = vpop.f32.mrb[0].mxu0
    %246 = vdwg.mxu0
    %v247 = vld [vmem:[%s3] sm:$0x1]
    %v249 = vlaneseq
    %v250 = vshrl.u32 %v249, 7
    %v251 = vsub.s32 0, %v250
    %v252 = vrot.slane %v247, %v251
    %v254 = vmul.f32 %v199, %v252
    %v255 = vmul.f32 %v204, %v252
    %v256 = vmul.f32 %v209, %v252
    %v257 = vmul.f32 %v214, %v252
    %v258 = vmul.f32 %v219, %v252
    %v259 = vmul.f32 %v224, %v252
    %v260 = vmul.f32 %v229, %v252
    %v261 = vmul.f32 %v234, %v252
    %v262 = vmul.f32 %v239, %v252
    %v263 = vmul.f32 %v244, %v252
    %v264 = vld [vmem:[%s4] sm:$0x1]
    %v266 = vlaneseq
    %v267 = vshrl.u32 %v266, 7
    %v268 = vsub.s32 0, %v267
    %v269 = vrot.slane %v264, %v268
    %v271 = vadd.f32 %v254, %v269
    %v272 = vadd.f32 %v255, %v269
    %v273 = vadd.f32 %v256, %v269
    %v274 = vadd.f32 %v257, %v269
    %v275 = vadd.f32 %v258, %v269
    %v276 = vadd.f32 %v259, %v269
    %v277 = vadd.f32 %v260, %v269
    %v278 = vadd.f32 %v261, %v269
    %v279 = vadd.f32 %v262, %v269
    %v280 = vadd.f32 %v263, %v269
    %v281 = vmax.f32 %v271, 0.0
    %v282 = vmax.f32 %v272, 0.0
    %v283 = vmax.f32 %v273, 0.0
    %v284 = vmax.f32 %v274, 0.0
    %v285 = vmax.f32 %v275, 0.0
    %v286 = vmax.f32 %v276, 0.0
    %v287 = vmax.f32 %v277, 0.0
    %v288 = vmax.f32 %v278, 0.0
    %v289 = vmax.f32 %v279, 0.0
    %v290 = vmax.f32 %v280, 0.0
    %v291 = vld [vmem:[%s5] sm:$0xff]
    %v292 = vld [vmem:[%s5 + $0x8] sm:$0xff]
    %v293 = vld [vmem:[%s5 + $0x10] sm:$0xff]
    %v294 = vld [vmem:[%s5 + $0x18] sm:$0xff]
    %v295 = vld [vmem:[%s5 + $0x20] sm:$0xff]
    %v296 = vld [vmem:[%s5 + $0x28] sm:$0xff]
    %v297 = vld [vmem:[%s5 + $0x30] sm:$0xff]
    %v298 = vld [vmem:[%s5 + $0x38] sm:$0xff]
    %vm299 = vcmask 523264
    %v301 = vsel %vm299, %v281, 0
    %v304 = vsel %vm299, %v282, 0
    %v307 = vsel %vm299, %v283, 0
    %v310 = vsel %vm299, %v284, 0
    %v313 = vsel %vm299, %v285, 0
    %v316 = vsel %vm299, %v286, 0
    %v319 = vsel %vm299, %v287, 0
    %v322 = vsel %vm299, %v288, 0
    %v325 = vsel %vm299, %v289, 0
    %v328 = vsel %vm299, %v290, 0
    %330 = vmatprep.subr.mxu0 0.0
    %331 = vmatpush1.msra.mxu0 %v291
    %332 = vmatprep.subr.mxu0 0.0
    %333 = vmatpush1.msra.mxu0 %v292
    %334 = vmatprep.subr.mxu0 0.0
    %335 = vmatpush1.msra.mxu0 %v293
    %336 = vmatprep.subr.mxu0 0.0
    %337 = vmatpush1.msra.mxu0 %v294
    %338 = vmatprep.subr.mxu0 0.0
    %339 = vmatpush1.msra.mxu0 %v295
    %340 = vmatprep.subr.mxu0 0.0
    %341 = vmatpush1.msra.mxu0 %v296
    %342 = vmatprep.subr.mxu0 0.0
    %343 = vmatpush1.msra.mxu0 %v297
    %344 = vmatprep.subr.mxu0 0.0
    %345 = vmatpush1.msra.mxu0 %v298
    %346 = vmatprep.subr.mxu0 0.0
    %347 = vmatpush1.msra.mxu0 0.0
    %348 = vmatprep.subr.mxu0 0.0
    %349 = vmatpush1.msra.mxu0 0.0
    %350 = vmatprep.subr.mxu0 0.0
    %351 = vmatpush1.msra.mxu0 0.0
    %352 = vmatprep.subr.mxu0 0.0
    %353 = vmatpush1.msra.mxu0 0.0
    %354 = vmatprep.subr.mxu0 0.0
    %355 = vmatpush1.msra.mxu0 0.0
    %356 = vmatprep.subr.mxu0 0.0
    %357 = vmatpush1.msra.mxu0 0.0
    %358 = vmatprep.subr.mxu0 0.0
    %359 = vmatpush1.msra.mxu0 0.0
    %360 = vmatprep.subr.mxu0 0.0
    %361 = vmatpush1.msra.mxu0 0.0
    %362 = vmatprep.subr.mxu0 0.0
    %363 = vmatpush1.msra.mxu0 0.0
    %364 = vmatprep.subr.mxu0 0.0
    %365 = vmatpush1.msra.mxu0 0.0
    %366 = vmatprep.subr.mxu0 0.0
    %367 = vmatpush1.msra.mxu0 0.0
    %368 = vmatprep.subr.mxu0 0.0
    %369 = vmatpush1.msra.mxu0 0.0
    %370 = vmatprep.subr.mxu0 0.0
    %371 = vmatpush1.msra.mxu0 0.0
    %372 = vmatprep.subr.mxu0 0.0
    %373 = vmatpush1.msra.mxu0 0.0
    %374 = vmatprep.subr.mxu0 0.0
    %375 = vmatpush1.msra.mxu0 0.0
    %376 = vmatprep.subr.mxu0 0.0
    %377 = vmatpush1.msra.mxu0 0.0
    %378 = vmatprep.subr.mxu0 0.0
    %379 = vmatpush1.msra.mxu0 0.0
    %380 = vmatprep.subr.mxu0 0.0
    %381 = vmatpush1.msra.mxu0 0.0
    %382 = vmatprep.subr.mxu0 0.0
    %383 = vmatpush1.msra.mxu0 0.0
    %384 = vmatprep.subr.mxu0 0.0
    %385 = vmatpush1.msra.mxu0 0.0
    %386 = vmatprep.subr.mxu0 0.0
    %387 = vmatpush1.msra.mxu0 0.0
    %388 = vmatprep.subr.mxu0 0.0
    %389 = vmatpush1.msra.mxu0 0.0
    %390 = vmatprep.subr.mxu0 0.0
    %391 = vmatpush1.msra.mxu0 0.0
    %392 = vmatprep.subr.mxu0 0.0
    %393 = vmatpush1.msra.mxu0 0.0
    %394 = vmatprep.mubr.f32.mxu0 0.0
    %395 = vmatmul.mubr.f32.gmra.mrb[0].mxu0 %v301
    %v396 = vpop.f32.mrb[0].mxu0
    %v397 = vadd.f32 0.0, %v396
    %v398 = vpop.f32.mrb[0].mxu0
    %399 = vmatprep.mubr.f32.mxu0 0.0
    %400 = vmatmul.mubr.f32.gmra.mrb[0].mxu0 %v304
    %v401 = vpop.f32.mrb[0].mxu0
    %v402 = vadd.f32 0.0, %v401
    %v403 = vpop.f32.mrb[0].mxu0
    %404 = vmatprep.mubr.f32.mxu0 0.0
    %405 = vmatmul.mubr.f32.gmra.mrb[0].mxu0 %v307
    %v406 = vpop.f32.mrb[0].mxu0
    %v407 = vadd.f32 0.0, %v406
    %v408 = vpop.f32.mrb[0].mxu0
    %409 = vmatprep.mubr.f32.mxu0 0.0
    %410 = vmatmul.mubr.f32.gmra.mrb[0].mxu0 %v310
    %v411 = vpop.f32.mrb[0].mxu0
    %v412 = vadd.f32 0.0, %v411
    %v413 = vpop.f32.mrb[0].mxu0
    %414 = vmatprep.mubr.f32.mxu0 0.0
    %415 = vmatmul.mubr.f32.gmra.mrb[0].mxu0 %v313
    %v416 = vpop.f32.mrb[0].mxu0
    %v417 = vadd.f32 0.0, %v416
    %v418 = vpop.f32.mrb[0].mxu0
    %419 = vmatprep.mubr.f32.mxu0 0.0
    %420 = vmatmul.mubr.f32.gmra.mrb[0].mxu0 %v316
    %v421 = vpop.f32.mrb[0].mxu0
    %v422 = vadd.f32 0.0, %v421
    %v423 = vpop.f32.mrb[0].mxu0
    %424 = vmatprep.mubr.f32.mxu0 0.0
    %425 = vmatmul.mubr.f32.gmra.mrb[0].mxu0 %v319
    %v426 = vpop.f32.mrb[0].mxu0
    %v427 = vadd.f32 0.0, %v426
    %v428 = vpop.f32.mrb[0].mxu0
    %429 = vmatprep.mubr.f32.mxu0 0.0
    %430 = vmatmul.mubr.f32.gmra.mrb[0].mxu0 %v322
    %v431 = vpop.f32.mrb[0].mxu0
    %v432 = vadd.f32 0.0, %v431
    %v433 = vpop.f32.mrb[0].mxu0
    %434 = vmatprep.mubr.f32.mxu0 0.0
    %435 = vmatmul.mubr.f32.gmra.mrb[0].mxu0 %v325
    %v436 = vpop.f32.mrb[0].mxu0
    %v437 = vadd.f32 0.0, %v436
    %v438 = vpop.f32.mrb[0].mxu0
    %439 = vmatprep.mubr.f32.mxu0 0.0
    %440 = vmatmul.mubr.f32.gmra.mrb[0].mxu0 %v328
    %v441 = vpop.f32.mrb[0].mxu0
    %v442 = vadd.f32 0.0, %v441
    %v443 = vpop.f32.mrb[0].mxu0
    %444 = vdwg.mxu0
    %v445 = vld [vmem:[#allocation7] sm:$0x1]
    %v447 = vlaneseq
    %v448 = vshrl.u32 %v447, 7
    %v449 = vsub.s32 0, %v448
    %v450 = vrot.slane %v445, %v449
    %v452 = vmul.f32 %v397, %v450
    %v453 = vmul.f32 %v402, %v450
    %v454 = vmul.f32 %v407, %v450
    %v455 = vmul.f32 %v412, %v450
    %v456 = vmul.f32 %v417, %v450
    %v457 = vmul.f32 %v422, %v450
    %v458 = vmul.f32 %v427, %v450
    %v459 = vmul.f32 %v432, %v450
    %v460 = vmul.f32 %v437, %v450
    %v461 = vmul.f32 %v442, %v450
    %v462 = vld [vmem:[%s7] sm:$0x1]
    %v464 = vlaneseq
    %v465 = vshrl.u32 %v464, 7
    %v466 = vsub.s32 0, %v465
    %v467 = vrot.slane %v462, %v466
    %v469 = vadd.f32 %v452, %v467
    %v470 = vadd.f32 %v453, %v467
    %v471 = vadd.f32 %v454, %v467
    %v472 = vadd.f32 %v455, %v467
    %v473 = vadd.f32 %v456, %v467
    %v474 = vadd.f32 %v457, %v467
    %v475 = vadd.f32 %v458, %v467
    %v476 = vadd.f32 %v459, %v467
    %v477 = vadd.f32 %v460, %v467
    %v478 = vadd.f32 %v461, %v467
    %v479 = vmax.f32 %v469, 0.0
    %v480 = vmax.f32 %v470, 0.0
    %v481 = vmax.f32 %v471, 0.0
    %v482 = vmax.f32 %v472, 0.0
    %v483 = vmax.f32 %v473, 0.0
    %v484 = vmax.f32 %v474, 0.0
    %v485 = vmax.f32 %v475, 0.0
    %v486 = vmax.f32 %v476, 0.0
    %v487 = vmax.f32 %v477, 0.0
    %v488 = vmax.f32 %v478, 0.0
    %v489 = vmax.f32 %v479, %v480
    %v490 = vmax.f32 %v489, %v481
    %v491 = vmax.f32 %v490, %v482
    %v492 = vmax.f32 %v491, %v483
    %v493 = vmax.f32 %v492, %v484
    %v494 = vmax.f32 %v493, %v485
    %v495 = vmax.f32 %v494, %v486
    %v496 = vmax.f32 %v495, %v487
    %v497 = vmax.f32 %v496, %v488
    %v498 = vld [vmem:[#allocation2] sm:$0xff]
    %v499 = vld [vmem:[%s8] sm:$0xf]
    %v500 = vld [vmem:[%s9] sm:$0xff]
    %v501 = vld [vmem:[%s9 + $0x8] sm:$0xff]
    %v502 = vld [vmem:[%s9 + $0x10] sm:$0xff]
    %v503 = vld [vmem:[%s9 + $0x18] sm:$0xff]
    %v504 = vld [vmem:[%s9 + $0x20] sm:$0xff]
    %v505 = vld [vmem:[%s9 + $0x28] sm:$0xff]
    %v506 = vld [vmem:[%s9 + $0x30] sm:$0xff]
    %v507 = vld [vmem:[%s9 + $0x38] sm:$0xff]
    %v509 = vsel %vm299, %v497, 0
    %511 = vmatprep.subr.mxu0 0.0
    %512 = vmatpush1.msra.mxu0 %v500
    %513 = vmatprep.subr.mxu0 0.0
    %514 = vmatpush1.msra.mxu0 %v501
    %515 = vmatprep.subr.mxu0 0.0
    %516 = vmatpush1.msra.mxu0 %v502
    %517 = vmatprep.subr.mxu0 0.0
    %518 = vmatpush1.msra.mxu0 %v503
    %519 = vmatprep.subr.mxu0 0.0
    %520 = vmatpush1.msra.mxu0 %v504
    %521 = vmatprep.subr.mxu0 0.0
    %522 = vmatpush1.msra.mxu0 %v505
    %523 = vmatprep.subr.mxu0 0.0
    %524 = vmatpush1.msra.mxu0 %v506
    %525 = vmatprep.subr.mxu0 0.0
    %526 = vmatpush1.msra.mxu0 %v507
    %527 = vmatprep.subr.mxu0 0.0
    %528 = vmatpush1.msra.mxu0 0.0
    %529 = vmatprep.subr.mxu0 0.0
    %530 = vmatpush1.msra.mxu0 0.0
    %531 = vmatprep.subr.mxu0 0.0
    %532 = vmatpush1.msra.mxu0 0.0
    %533 = vmatprep.subr.mxu0 0.0
    %534 = vmatpush1.msra.mxu0 0.0
    %535 = vmatprep.subr.mxu0 0.0
    %536 = vmatpush1.msra.mxu0 0.0
    %537 = vmatprep.subr.mxu0 0.0
    %538 = vmatpush1.msra.mxu0 0.0
    %539 = vmatprep.subr.mxu0 0.0
    %540 = vmatpush1.msra.mxu0 0.0
    %541 = vmatprep.subr.mxu0 0.0
    %542 = vmatpush1.msra.mxu0 0.0
    %543 = vmatprep.subr.mxu0 0.0
    %544 = vmatpush1.msra.mxu0 0.0
    %545 = vmatprep.subr.mxu0 0.0
    %546 = vmatpush1.msra.mxu0 0.0
    %547 = vmatprep.subr.mxu0 0.0
    %548 = vmatpush1.msra.mxu0 0.0
    %549 = vmatprep.subr.mxu0 0.0
    %550 = vmatpush1.msra.mxu0 0.0
    %551 = vmatprep.subr.mxu0 0.0
    %552 = vmatpush1.msra.mxu0 0.0
    %553 = vmatprep.subr.mxu0 0.0
    %554 = vmatpush1.msra.mxu0 0.0
    %555 = vmatprep.subr.mxu0 0.0
    %556 = vmatpush1.msra.mxu0 0.0
    %557 = vmatprep.subr.mxu0 0.0
    %558 = vmatpush1.msra.mxu0 0.0
    %559 = vmatprep.subr.mxu0 0.0
    %560 = vmatpush1.msra.mxu0 0.0
    %561 = vmatprep.subr.mxu0 0.0
    %562 = vmatpush1.msra.mxu0 0.0
    %563 = vmatprep.subr.mxu0 0.0
    %564 = vmatpush1.msra.mxu0 0.0
    %565 = vmatprep.subr.mxu0 0.0
    %566 = vmatpush1.msra.mxu0 0.0
    %567 = vmatprep.subr.mxu0 0.0
    %568 = vmatpush1.msra.mxu0 0.0
    %569 = vmatprep.subr.mxu0 0.0
    %570 = vmatpush1.msra.mxu0 0.0
    %571 = vmatprep.subr.mxu0 0.0
    %572 = vmatpush1.msra.mxu0 0.0
    %573 = vmatprep.subr.mxu0 0.0
    %574 = vmatpush1.msra.mxu0 0.0
    %575 = vmatprep.mubr.f32.mxu0 0.0
    %576 = vmatmul.mubr.f32.gmra.mrb[0].mxu0 %v509
    %v577 = vpop.f32.mrb[0].mxu0
    %v578 = vadd.f32 0.0, %v577
    %v579 = vpop.f32.mrb[0].mxu0
    %580 = vdwg.mxu0
    %v582 = vsel %vm97, %v498, 0
    %v585 = vsel %vm128, %v499, 0
    %587 = vmatprep.subr.mxu0 0.0
    %588 = vmatpush1.msra.mxu0 %v585
    %589 = vmatprep.subr.mxu0 0.0
    %590 = vmatpush1.msra.mxu0 0.0
    %591 = vmatprep.subr.mxu0 0.0
    %592 = vmatpush1.msra.mxu0 0.0
    %593 = vmatprep.subr.mxu0 0.0
    %594 = vmatpush1.msra.mxu0 0.0
    %595 = vmatprep.subr.mxu0 0.0
    %596 = vmatpush1.msra.mxu0 0.0
    %597 = vmatprep.subr.mxu0 0.0
    %598 = vmatpush1.msra.mxu0 0.0
    %599 = vmatprep.subr.mxu0 0.0
    %600 = vmatpush1.msra.mxu0 0.0
    %601 = vmatprep.subr.mxu0 0.0
    %602 = vmatpush1.msra.mxu0 0.0
    %603 = vmatprep.subr.mxu0 0.0
    %604 = vmatpush1.msra.mxu0 0.0
    %605 = vmatprep.subr.mxu0 0.0
    %606 = vmatpush1.msra.mxu0 0.0
    %607 = vmatprep.subr.mxu0 0.0
    %608 = vmatpush1.msra.mxu0 0.0
    %609 = vmatprep.subr.mxu0 0.0
    %610 = vmatpush1.msra.mxu0 0.0
    %611 = vmatprep.subr.mxu0 0.0
    %612 = vmatpush1.msra.mxu0 0.0
    %613 = vmatprep.subr.mxu0 0.0
    %614 = vmatpush1.msra.mxu0 0.0
    %615 = vmatprep.subr.mxu0 0.0
    %616 = vmatpush1.msra.mxu0 0.0
    %617 = vmatprep.subr.mxu0 0.0
    %618 = vmatpush1.msra.mxu0 0.0
    %619 = vmatprep.subr.mxu0 0.0
    %620 = vmatpush1.msra.mxu0 0.0
    %621 = vmatprep.subr.mxu0 0.0
    %622 = vmatpush1.msra.mxu0 0.0
    %623 = vmatprep.subr.mxu0 0.0
    %624 = vmatpush1.msra.mxu0 0.0
    %625 = vmatprep.subr.mxu0 0.0
    %626 = vmatpush1.msra.mxu0 0.0
    %627 = vmatprep.subr.mxu0 0.0
    %628 = vmatpush1.msra.mxu0 0.0
    %629 = vmatprep.subr.mxu0 0.0
    %630 = vmatpush1.msra.mxu0 0.0
    %631 = vmatprep.subr.mxu0 0.0
    %632 = vmatpush1.msra.mxu0 0.0
    %633 = vmatprep.subr.mxu0 0.0
    %634 = vmatpush1.msra.mxu0 0.0
    %635 = vmatprep.subr.mxu0 0.0
    %636 = vmatpush1.msra.mxu0 0.0
    %637 = vmatprep.subr.mxu0 0.0
    %638 = vmatpush1.msra.mxu0 0.0
    %639 = vmatprep.subr.mxu0 0.0
    %640 = vmatpush1.msra.mxu0 0.0
    %641 = vmatprep.subr.mxu0 0.0
    %642 = vmatpush1.msra.mxu0 0.0
    %643 = vmatprep.subr.mxu0 0.0
    %644 = vmatpush1.msra.mxu0 0.0
    %645 = vmatprep.subr.mxu0 0.0
    %646 = vmatpush1.msra.mxu0 0.0
    %647 = vmatprep.subr.mxu0 0.0
    %648 = vmatpush1.msra.mxu0 0.0
    %649 = vmatprep.subr.mxu0 0.0
    %650 = vmatpush1.msra.mxu0 0.0
    %651 = vmatprep.mubr.f32.mxu0 0.0
    %652 = vmatmul.mubr.f32.gmra.mrb[0].mxu0 %v582
    %v653 = vpop.f32.mrb[0].mxu0
    %v654 = vadd.f32 %v578, %v653
    %v655 = vpop.f32.mrb[0].mxu0
    %656 = vdwg.mxu0
    %v657 = vld [vmem:[%s10] sm:$0x1]
    %v659 = vlaneseq
    %v660 = vshrl.u32 %v659, 7
    %v661 = vsub.s32 0, %v660
    %v662 = vrot.slane %v657, %v661
    %v664 = vadd.f32 %v654, %v662
    %v665 = vmax.f32 %v664, 0.0
    %v666 = vld [vmem:[%s11] sm:$0xff]
    %v667 = vld [vmem:[%s11 + $0x8] sm:$0xff]
    %v668 = vld [vmem:[%s11 + $0x10] sm:$0xff]
    %v669 = vld [vmem:[%s11 + $0x18] sm:$0xff]
    %v670 = vld [vmem:[%s11 + $0x20] sm:$0xff]
    %v671 = vld [vmem:[%s11 + $0x28] sm:$0xff]
    %v672 = vld [vmem:[%s11 + $0x30] sm:$0xff]
    %v673 = vld [vmem:[%s11 + $0x38] sm:$0xff]
    %v674 = vld [vmem:[%s12] sm:$0x1]
    %v676 = vlaneseq
    %v677 = vshrl.u32 %v676, 7
    %v678 = vsub.s32 0, %v677
    %v679 = vrot.slane %v674, %v678
    %v682 = vsel %vm299, %v665, 0
    %684 = vmatprep.subr.mxu0 0.0
    %685 = vmatpush1.msra.mxu0 %v666
    %686 = vmatprep.subr.mxu0 0.0
    %687 = vmatpush1.msra.mxu0 %v667
    %688 = vmatprep.subr.mxu0 0.0
    %689 = vmatpush1.msra.mxu0 %v668
    %690 = vmatprep.subr.mxu0 0.0
    %691 = vmatpush1.msra.mxu0 %v669
    %692 = vmatprep.subr.mxu0 0.0
    %693 = vmatpush1.msra.mxu0 %v670
    %694 = vmatprep.subr.mxu0 0.0
    %695 = vmatpush1.msra.mxu0 %v671
    %696 = vmatprep.subr.mxu0 0.0
    %697 = vmatpush1.msra.mxu0 %v672
    %698 = vmatprep.subr.mxu0 0.0
    %699 = vmatpush1.msra.mxu0 %v673
    %700 = vmatprep.subr.mxu0 0.0
    %701 = vmatpush1.msra.mxu0 0.0
    %702 = vmatprep.subr.mxu0 0.0
    %703 = vmatpush1.msra.mxu0 0.0
    %704 = vmatprep.subr.mxu0 0.0
    %705 = vmatpush1.msra.mxu0 0.0
    %706 = vmatprep.subr.mxu0 0.0
    %707 = vmatpush1.msra.mxu0 0.0
    %708 = vmatprep.subr.mxu0 0.0
    %709 = vmatpush1.msra.mxu0 0.0
    %710 = vmatprep.subr.mxu0 0.0
    %711 = vmatpush1.msra.mxu0 0.0
    %712 = vmatprep.subr.mxu0 0.0
    %713 = vmatpush1.msra.mxu0 0.0
    %714 = vmatprep.subr.mxu0 0.0
    %715 = vmatpush1.msra.mxu0 0.0
    %716 = vmatprep.subr.mxu0 0.0
    %717 = vmatpush1.msra.mxu0 0.0
    %718 = vmatprep.subr.mxu0 0.0
    %719 = vmatpush1.msra.mxu0 0.0
    %720 = vmatprep.subr.mxu0 0.0
    %721 = vmatpush1.msra.mxu0 0.0
    %722 = vmatprep.subr.mxu0 0.0
    %723 = vmatpush1.msra.mxu0 0.0
    %724 = vmatprep.subr.mxu0 0.0
    %725 = vmatpush1.msra.mxu0 0.0
    %726 = vmatprep.subr.mxu0 0.0
    %727 = vmatpush1.msra.mxu0 0.0
    %728 = vmatprep.subr.mxu0 0.0
    %729 = vmatpush1.msra.mxu0 0.0
    %730 = vmatprep.subr.mxu0 0.0
    %731 = vmatpush1.msra.mxu0 0.0
    %732 = vmatprep.subr.mxu0 0.0
    %733 = vmatpush1.msra.mxu0 0.0
    %734 = vmatprep.subr.mxu0 0.0
    %735 = vmatpush1.msra.mxu0 0.0
    %736 = vmatprep.subr.mxu0 0.0
    %737 = vmatpush1.msra.mxu0 0.0
    %738 = vmatprep.subr.mxu0 0.0
    %739 = vmatpush1.msra.mxu0 0.0
    %740 = vmatprep.subr.mxu0 0.0
    %741 = vmatpush1.msra.mxu0 0.0
    %742 = vmatprep.subr.mxu0 0.0
    %743 = vmatpush1.msra.mxu0 0.0
    %744 = vmatprep.subr.mxu0 0.0
    %745 = vmatpush1.msra.mxu0 0.0
    %746 = vmatprep.subr.mxu0 0.0
    %747 = vmatpush1.msra.mxu0 0.0
    %748 = vmatprep.mubr.f32.mxu0 0.0
    %749 = vmatmul.mubr.f32.gmra.mrb[0].mxu0 %v682
    %v750 = vpop.f32.mrb[0].mxu0
    %v751 = vadd.f32 %v679, %v750
    %v752 = vpop.f32.mrb[0].mxu0
    %753 = vdwg.mxu0
    %v754 = vmax.f32 %v751, 0.0
    %v755 = vld [vmem:[%s13] sm:$0xff]
    %v756 = vld [vmem:[%s13 + $0x8] sm:$0xff]
    %v757 = vld [vmem:[%s13 + $0x10] sm:$0xff]
    %v758 = vld [vmem:[%s13 + $0x18] sm:$0xff]
    %v759 = vld [vmem:[%s13 + $0x20] sm:$0xff]
    %v760 = vld [vmem:[%s13 + $0x28] sm:$0xff]
    %v761 = vld [vmem:[%s13 + $0x30] sm:$0xff]
    %v762 = vld [vmem:[%s13 + $0x38] sm:$0xff]
    %v763 = vld [vmem:[%s14] sm:$0x1]
    %v765 = vlaneseq
    %v766 = vshrl.u32 %v765, 7
    %v767 = vsub.s32 0, %v766
    %v768 = vrot.slane %v763, %v767
    %v771 = vsel %vm299, %v754, 0
    %773 = vmatprep.subr.mxu0 0.0
    %774 = vmatpush1.msra.mxu0 %v755
    %775 = vmatprep.subr.mxu0 0.0
    %776 = vmatpush1.msra.mxu0 %v756
    %777 = vmatprep.subr.mxu0 0.0
    %778 = vmatpush1.msra.mxu0 %v757
    %779 = vmatprep.subr.mxu0 0.0
    %780 = vmatpush1.msra.mxu0 %v758
    %781 = vmatprep.subr.mxu0 0.0
    %782 = vmatpush1.msra.mxu0 %v759
    %783 = vmatprep.subr.mxu0 0.0
    %784 = vmatpush1.msra.mxu0 %v760
    %785 = vmatprep.subr.mxu0 0.0
    %786 = vmatpush1.msra.mxu0 %v761
    %787 = vmatprep.subr.mxu0 0.0
    %788 = vmatpush1.msra.mxu0 %v762
    %789 = vmatprep.subr.mxu0 0.0
    %790 = vmatpush1.msra.mxu0 0.0
    %791 = vmatprep.subr.mxu0 0.0
    %792 = vmatpush1.msra.mxu0 0.0
    %793 = vmatprep.subr.mxu0 0.0
    %794 = vmatpush1.msra.mxu0 0.0
    %795 = vmatprep.subr.mxu0 0.0
    %796 = vmatpush1.msra.mxu0 0.0
    %797 = vmatprep.subr.mxu0 0.0
    %798 = vmatpush1.msra.mxu0 0.0
    %799 = vmatprep.subr.mxu0 0.0
    %800 = vmatpush1.msra.mxu0 0.0
    %801 = vmatprep.subr.mxu0 0.0
    %802 = vmatpush1.msra.mxu0 0.0
    %803 = vmatprep.subr.mxu0 0.0
    %804 = vmatpush1.msra.mxu0 0.0
    %805 = vmatprep.subr.mxu0 0.0
    %806 = vmatpush1.msra.mxu0 0.0
    %807 = vmatprep.subr.mxu0 0.0
    %808 = vmatpush1.msra.mxu0 0.0
    %809 = vmatprep.subr.mxu0 0.0
    %810 = vmatpush1.msra.mxu0 0.0
    %811 = vmatprep.subr.mxu0 0.0
    %812 = vmatpush1.msra.mxu0 0.0
    %813 = vmatprep.subr.mxu0 0.0
    %814 = vmatpush1.msra.mxu0 0.0
    %815 = vmatprep.subr.mxu0 0.0
    %816 = vmatpush1.msra.mxu0 0.0
    %817 = vmatprep.subr.mxu0 0.0
    %818 = vmatpush1.msra.mxu0 0.0
    %819 = vmatprep.subr.mxu0 0.0
    %820 = vmatpush1.msra.mxu0 0.0
    %821 = vmatprep.subr.mxu0 0.0
    %822 = vmatpush1.msra.mxu0 0.0
    %823 = vmatprep.subr.mxu0 0.0
    %824 = vmatpush1.msra.mxu0 0.0
    %825 = vmatprep.subr.mxu0 0.0
    %826 = vmatpush1.msra.mxu0 0.0
    %827 = vmatprep.subr.mxu0 0.0
    %828 = vmatpush1.msra.mxu0 0.0
    %829 = vmatprep.subr.mxu0 0.0
    %830 = vmatpush1.msra.mxu0 0.0
    %831 = vmatprep.subr.mxu0 0.0
    %832 = vmatpush1.msra.mxu0 0.0
    %833 = vmatprep.subr.mxu0 0.0
    %834 = vmatpush1.msra.mxu0 0.0
    %835 = vmatprep.subr.mxu0 0.0
    %836 = vmatpush1.msra.mxu0 0.0
    %837 = vmatprep.mubr.f32.mxu0 0.0
    %838 = vmatmul.mubr.f32.gmra.mrb[0].mxu0 %v771
    %v839 = vpop.f32.mrb[0].mxu0
    %v840 = vadd.f32 %v768, %v839
    %v841 = vpop.f32.mrb[0].mxu0
    %842 = vdwg.mxu0
    %vm843 = vcmask 39936
    %844 = vst.msk [vmem:[#allocation8] sm:$0xff] %vm843, %v840
    // Predicated region
    $region74: #{tpu_custom_call.1} parent=1 // pred_check
      _
    $region75: #{tpu_custom_call.1} parent=1 // pred_check_branch
      %846 = sbr.rel (0) target = $region77
    $region76: #{tpu_custom_call.1} parent=1 // pred_region
      %s848 = ssub.s32 128, 128
      %849 = vsyncadd [#allocation4], %s848
      %s851 = sshll.u32 [#allocation8], 4
      %s852 = int_to_ptr.vmem [resolvable:$true] %s851
      %854 = dma.vmem_to_hbm [thread:$0]  %s852, 128, %s15, [#allocation4]
    $region77: #{tpu_custom_call.1} parent=1 // pred_fallthru
      _
    // Predicated region
    $region78: #{tpu_custom_call.1} parent=1 // pred_check
      _
    $region79: #{tpu_custom_call.1} parent=1 // pred_check_branch
      %856 = sbr.rel (0) target = $region81
    $region80: #{tpu_custom_call.1} parent=1 // pred_region
      %857 = dma.done [#allocation4], 128
    $region81: #{tpu_custom_call.1} parent=1 // pred_fallthru
      _
    %858 = vsyncpa [#allocation3], 1
    %859 = vsyncpa [#allocation6], 1
    %860 = vsyncpa [#allocation4], 1

</llo_original>
